<compile_context>
chip_gen: v7x
topology: tpu7x:2x2x1
jax: 0.10.0
libtpu: 0.0.40
codegen_flags: <defaults>
</compile_context>

<pallas_src>
import functools

import jax
import jax.numpy as jnp
from jax.experimental import pallas as pl
from jax.experimental.pallas import tpu as pltpu

HIDDEN = 64          # model hidden size (nn.Linear(in, 64))
HIDDEN_PAD = 128     # padded to a full lane width
NEG_SLOPE = 0.01     # nn.LeakyReLU(0.01)


def discriminator_kernel(xt_ref, w1_ref, b1_ref, w2_ref, b2_ref, o_ref):
    # Linear 1 on the MXU, computed transposed: (H, Din) @ (Din, TB) -> (H, TB).
    # Hidden lives on sublanes, batch on lanes (lane-dense all the way through).
    h = jnp.dot(w1_ref[...], xt_ref[...], preferred_element_type=jnp.float32)
    h = h + b1_ref[...]                      # (H, 1) bias broadcast across lanes
    # LeakyReLU(0.01) on the VPU.
    h = jnp.where(h > 0, h, NEG_SLOPE * h)
    # Linear 2 (64 -> 1) as VPU multiply + sublane reduction (no N=1 matmul).
    # Padded hidden rows are exactly zero in w2, so they contribute nothing.
    z = jnp.sum(h * w2_ref[...], axis=0, keepdims=True) + b2_ref[0, 0]  # (1, TB)
    # Sigmoid via EUP exp + approximate EUP reciprocal.
    o_ref[...] = pl.reciprocal(1.0 + jnp.exp(-z), approx=True)


@functools.partial(jax.jit, static_argnames=("tb",))
def discriminator_forward(x, w1, b1, w2, b2, *, tb=128):
    """x: (B, Din) f32.  Params in PyTorch layout:
    w1: (64, Din), b1: (64,), w2: (1, 64), b2: (1,)."""
    B, din = x.shape
    hid = w1.shape[0]

    # Zero-pad hidden 64 -> 128; keep weights in (out, in) layout for the
    # transposed matmul.  Padded rows are zero -> no effect on the output.
    w1p = jnp.zeros((HIDDEN_PAD, din), jnp.float32).at[:hid, :].set(w1)
    b1p = jnp.zeros((HIDDEN_PAD, 1), jnp.float32).at[:hid, 0].set(b1)
    w2p = jnp.zeros((HIDDEN_PAD, 1), jnp.float32).at[:hid, 0].set(w2[0])
    b2p = b2.reshape(1, 1).astype(jnp.float32)

    # Pad the batch up to a multiple of the batch tile and transpose so the
    # batch is the lane (last) axis.  Wrapper-side layout plumbing only.
    n_tiles = pl.cdiv(B, tb)
    b_pad = n_tiles * tb
    xt = jnp.pad(x.astype(jnp.float32).T, ((0, 0), (0, b_pad - B)))

    out_t = pl.pallas_call(
        discriminator_kernel,
        out_shape=jax.ShapeDtypeStruct((1, b_pad), jnp.float32),
        grid=(n_tiles,),
        in_specs=[
            pl.BlockSpec((din, tb), lambda i: (0, i)),          # x^T batch tile
            pl.BlockSpec((HIDDEN_PAD, din), lambda i: (0, 0)),  # W1 resident
            pl.BlockSpec((HIDDEN_PAD, 1), lambda i: (0, 0)),    # b1 resident
            pl.BlockSpec((HIDDEN_PAD, 1), lambda i: (0, 0)),    # w2 resident
            pl.BlockSpec(memory_space=pltpu.MemorySpace.SMEM),  # b2 scalar
        ],
        out_specs=pl.BlockSpec((1, tb), lambda i: (0, i)),      # lane-dense out
        compiler_params=pltpu.CompilerParams(
            dimension_semantics=("parallel",),
        ),
    )(xt, w1p, b1p, w2p, b2p)

    # Back to the PyTorch output shape (B, 1).
    return out_t[0, :B].reshape(B, 1)


def init_linear_params(key, fan_in, fan_out):
    """PyTorch nn.Linear default init, in PyTorch (out, in) layout."""
    kw, kb = jax.random.split(key)
    bound = 1.0 / jnp.sqrt(jnp.float32(fan_in))
    w = jax.random.uniform(kw, (fan_out, fan_in), jnp.float32, -bound, bound)
    b = jax.random.uniform(kb, (fan_out,), jnp.float32, -bound, bound)
    return w, b


def _reference(x, w1, b1, w2, b2):
    h = x @ w1.T + b1
    h = jnp.where(h > 0, h, NEG_SLOPE * h)
    return jax.nn.sigmoid(h @ w2.T + b2)


if __name__ == "__main__":
    key = jax.random.PRNGKey(0)
    k_x1, k_x2, k_l1, k_l2 = jax.random.split(key, 4)

    in_image = 32  # flattened image size fed to Discriminator
    w1, b1 = init_linear_params(k_l1, in_image, HIDDEN)
    w2, b2 = init_linear_params(k_l2, HIDDEN, 1)

    # Small case (single batch tile, batch not a multiple of the tile).
    x_small = jax.random.normal(k_x1, (8, in_image), jnp.float32)
    out_small = jax.block_until_ready(discriminator_forward(x_small, w1, b1, w2, b2))
    ref_small = _reference(x_small, w1, b1, w2, b2)
    assert out_small.shape == (8, 1)
    assert jnp.allclose(out_small, ref_small, atol=2e-3), "mismatch (small batch)"

    # Multi-tile case (exercises the batch grid + padding path).
    x_big = jax.random.normal(k_x2, (300, in_image), jnp.float32)
    out_big = jax.block_until_ready(discriminator_forward(x_big, w1, b1, w2, b2))
    ref_big = _reference(x_big, w1, b1, w2, b2)
    assert out_big.shape == (300, 1)
    assert jnp.allclose(out_big, ref_big, atol=2e-3), "mismatch (multi-tile batch)"

    print("KERNEL_OK")
</pallas_src>

<mosaic_0001>
module attributes {stable_mosaic.version = 11 : i64} {
  func.func @discriminator_kernel(%arg0: i32, %arg1: memref<32x128xf32, #tpu.memory_space<vmem>>, %arg2: memref<128x32xf32, #tpu.memory_space<vmem>>, %arg3: memref<128x1xf32, #tpu.memory_space<vmem>>, %arg4: memref<128x1xf32, #tpu.memory_space<vmem>>, %arg5: memref<1x1xf32, #tpu.memory_space<smem>>, %arg6: memref<1x128xf32, #tpu.memory_space<vmem>>) attributes {dimension_semantics = [#tpu.dimension_semantics<parallel>], iteration_bounds = array<i64: 1>, scalar_prefetch = 0 : i64, scratch_operands = 0 : i64, tpu.core_type = #tpu.core_type<tc>, window_params = [{transform_indices = @transform_0, window_bounds = array<i64: 32, 128>}, {pipeline_mode = #tpu.pipeline_mode<synchronous>, transform_indices = @transform_1, window_bounds = array<i64: 128, 32>}, {pipeline_mode = #tpu.pipeline_mode<synchronous>, transform_indices = @transform_2, window_bounds = array<i64: 128, 1>}, {pipeline_mode = #tpu.pipeline_mode<synchronous>, transform_indices = @transform_3, window_bounds = array<i64: 128, 1>}, {transform_indices = @transform_4, window_bounds = array<i64: 1, 1>}, {transform_indices = @transform_5, window_bounds = array<i64: 1, 128>}]} {
    %c0 = arith.constant 0 : index
    %c0_0 = arith.constant 0 : index
    %0 = vector.load %arg2[%c0, %c0_0] : memref<128x32xf32, #tpu.memory_space<vmem>>, vector<128x32xf32>
    %c0_1 = arith.constant 0 : index
    %c0_2 = arith.constant 0 : index
    %1 = vector.load %arg1[%c0_1, %c0_2] : memref<32x128xf32, #tpu.memory_space<vmem>>, vector<32x128xf32>
    %cst = arith.constant dense<0.000000e+00> : vector<128x128xf32>
    %2 = tpu.matmul %0, %1, %cst {dimension_numbers = #tpu.dot_dimension_numbers<[1], [0], [0], [1], [0, 0, 1, 1], [], []>} : vector<128x32xf32>, vector<32x128xf32>, vector<128x128xf32> -> vector<128x128xf32>
    %c0_3 = arith.constant 0 : index
    %c0_4 = arith.constant 0 : index
    %3 = vector.load %arg3[%c0_3, %c0_4] : memref<128x1xf32, #tpu.memory_space<vmem>>, vector<128x1xf32>
    %4 = vector.broadcast %3 : vector<128x1xf32> to vector<128x128xf32>
    %5 = arith.addf %2, %4 : vector<128x128xf32>
    %cst_5 = arith.constant 0.000000e+00 : f32
    %6 = vector.broadcast %cst_5 : f32 to vector<128x128xf32>
    %7 = arith.cmpf ogt, %5, %6 : vector<128x128xf32>
    %cst_6 = arith.constant 0.00999999977 : f32
    %8 = vector.broadcast %cst_6 : f32 to vector<128x128xf32>
    %9 = arith.mulf %8, %5 : vector<128x128xf32>
    %10 = arith.select %7, %5, %9 : vector<128x128xi1>, vector<128x128xf32>
    %c0_7 = arith.constant 0 : index
    %c0_8 = arith.constant 0 : index
    %11 = vector.load %arg4[%c0_7, %c0_8] : memref<128x1xf32, #tpu.memory_space<vmem>>, vector<128x1xf32>
    %12 = vector.broadcast %11 : vector<128x1xf32> to vector<128x128xf32>
    %13 = arith.mulf %10, %12 : vector<128x128xf32>
    %cst_9 = arith.constant dense<0.000000e+00> : vector<128xf32>
    %14 = vector.multi_reduction <add>, %13, %cst_9 [0] : vector<128x128xf32> to vector<128xf32>
    %15 = vector.shape_cast %14 : vector<128xf32> to vector<1x128xf32>
    %c0_10 = arith.constant 0 : index
    %c0_11 = arith.constant 0 : index
    %16 = memref.load %arg5[%c0_10, %c0_11] : memref<1x1xf32, #tpu.memory_space<smem>>
    %17 = vector.broadcast %16 : f32 to vector<1x128xf32>
    %18 = arith.addf %15, %17 : vector<1x128xf32>
    %cst_12 = arith.constant 0.000000e+00 : f32
    %19 = vector.broadcast %cst_12 : f32 to vector<1x128xf32>
    %20 = arith.subf %19, %18 : vector<1x128xf32>
    %21 = math.exp %20 : vector<1x128xf32>
    %cst_13 = arith.constant 1.000000e+00 : f32
    %22 = vector.broadcast %cst_13 : f32 to vector<1x128xf32>
    %23 = arith.addf %22, %21 : vector<1x128xf32>
    %24 = tpu.reciprocal %23 {approx = true} : vector<1x128xf32> -> vector<1x128xf32>
    %c0_14 = arith.constant 0 : index
    %c0_15 = arith.constant 0 : index
    %25 = vector.load %arg6[%c0_14, %c0_15] : memref<1x128xf32, #tpu.memory_space<vmem>>, vector<1x128xf32>
    tpu.vector_store %arg6[%c0_14, %c0_15], %24 {strides = array<i32>} : memref<1x128xf32, #tpu.memory_space<vmem>>, vector<1x128xf32>,
    return
  }
  func.func @transform_0(%arg0: i32) -> (i32, i32) {
    %c0_i32 = arith.constant 0 : i32
    %c0_i32_0 = arith.constant 0 : i32
    return %c0_i32, %arg0 : i32, i32
  }
  func.func @transform_1(%arg0: i32) -> (i32, i32) {
    %c0_i32 = arith.constant 0 : i32
    %c0_i32_0 = arith.constant 0 : i32
    %c0_i32_1 = arith.constant 0 : i32
    return %c0_i32, %c0_i32_0 : i32, i32
  }
  func.func @transform_2(%arg0: i32) -> (i32, i32) {
    %c0_i32 = arith.constant 0 : i32
    %c0_i32_0 = arith.constant 0 : i32
    %c0_i32_1 = arith.constant 0 : i32
    return %c0_i32, %c0_i32_0 : i32, i32
  }
  func.func @transform_3(%arg0: i32) -> (i32, i32) {
    %c0_i32 = arith.constant 0 : i32
    %c0_i32_0 = arith.constant 0 : i32
    %c0_i32_1 = arith.constant 0 : i32
    return %c0_i32, %c0_i32_0 : i32, i32
  }
  func.func @transform_4(%arg0: i32) -> (i32, i32) {
    %c0_i32 = arith.constant 0 : i32
    %c0_i32_0 = arith.constant 0 : i32
    %c0_i32_1 = arith.constant 0 : i32
    return %c0_i32, %c0_i32_0 : i32, i32
  }
  func.func @transform_5(%arg0: i32) -> (i32, i32) {
    %c0_i32 = arith.constant 0 : i32
    %c0_i32_0 = arith.constant 0 : i32
    return %c0_i32, %arg0 : i32, i32
  }
}

</mosaic_0001>

<llo_original>
// kernel: discriminator_forward.1
$region0: #{discriminator_forward.1}
  #allocation0 [shape = 'u32[]', space=smem, size = 0x4, offset = 0x4, fixed_abs, tag = 'smem constant byte address 0x4 - core index']
  #allocation1 [shape = 'u32[144,128]{1,0:T(1,128)}', space=vmem, size = 0x12000, scoped, tag = 'internal scratch']
  #allocation2 [shape = 'f32[1,1]{1,0:T(1,128)S(6)}', space=smem, size = 0x200, scoped, tag = 'scoped memory for discriminator_forward.1']
  %s0 = inlined_call_operand.vmem [shape: f32[32,128], index: 0, kind: input, shape index: {}]
  %s1 = inlined_call_operand.vmem [shape: f32[128,32], index: 1, kind: input, shape index: {}]
  %s2 = inlined_call_operand.vmem [shape: f32[128,1], index: 2, kind: input, shape index: {}]
  %s3 = inlined_call_operand.vmem [shape: f32[128,1], index: 3, kind: input, shape index: {}]
  %s4 = inlined_call_operand.<no memory space> [shape: f32[1,1], index: 4, kind: input, shape index: {}]
  %s5 = inlined_call_operand.vmem [shape: f32[1,128], index: 5, kind: output, shape index: {}]
  %s6 = sld [smem:[#allocation0]]
  $region30: #{discriminator_forward.1} parent=0
    _
  %s8 = ssub.s32 1, %s6
  %s9 = scalar_select 0, %s8, %s6
  %10 = sst [smem:[#allocation2]] %s4
  // Predicated region
  $region2: #{discriminator_forward.1} parent=0 // pred_check
    _
  $region3: #{discriminator_forward.1} parent=0 // pred_check_branch
    %12 = sbr.rel (0) target = $region5
  $region4: #{discriminator_forward.1} parent=0 // pred_region
    _
  $region5: #{discriminator_forward.1} parent=0 // pred_fallthru
    _
  // Predicated region
  $region6: #{discriminator_forward.1} parent=0 // pred_check
    _
  $region7: #{discriminator_forward.1} parent=0 // pred_check_branch
    %14 = sbr.rel (0) target = $region9
  $region8: #{discriminator_forward.1} parent=0 // pred_region
    _
  $region9: #{discriminator_forward.1} parent=0 // pred_fallthru
    _
  // Predicated region
  $region10: #{discriminator_forward.1} parent=0 // pred_check
    _
  $region11: #{discriminator_forward.1} parent=0 // pred_check_branch
    %16 = sbr.rel (0) target = $region13
  $region12: #{discriminator_forward.1} parent=0 // pred_region
    _
  $region13: #{discriminator_forward.1} parent=0 // pred_fallthru
    _
  // Predicated region
  $region14: #{discriminator_forward.1} parent=0 // pred_check
    _
  $region15: #{discriminator_forward.1} parent=0 // pred_check_branch
    %18 = sbr.rel (0) target = $region17
  $region16: #{discriminator_forward.1} parent=0 // pred_region
    _
  $region17: #{discriminator_forward.1} parent=0 // pred_fallthru
    _
  // Predicated region
  $region18: #{discriminator_forward.1} parent=0 // pred_check
    _
  $region19: #{discriminator_forward.1} parent=0 // pred_check_branch
    %20 = sbr.rel (0) target = $region21
  $region20: #{discriminator_forward.1} parent=0 // pred_region
    _
  $region21: #{discriminator_forward.1} parent=0 // pred_fallthru
    _
  %v21 = vld [vmem:[%s1] sm:$0xff]
  %v22 = vld [vmem:[%s1 + $0x8] sm:$0xff]
  %v23 = vld [vmem:[%s1 + $0x10] sm:$0xff]
  %v24 = vld [vmem:[%s1 + $0x18] sm:$0xff]
  %v25 = vld [vmem:[%s1 + $0x20] sm:$0xff]
  %v26 = vld [vmem:[%s1 + $0x28] sm:$0xff]
  %v27 = vld [vmem:[%s1 + $0x30] sm:$0xff]
  %v28 = vld [vmem:[%s1 + $0x38] sm:$0xff]
  %v29 = vld [vmem:[%s1 + $0x40] sm:$0xff]
  %v30 = vld [vmem:[%s1 + $0x48] sm:$0xff]
  %v31 = vld [vmem:[%s1 + $0x50] sm:$0xff]
  %v32 = vld [vmem:[%s1 + $0x58] sm:$0xff]
  %v33 = vld [vmem:[%s1 + $0x60] sm:$0xff]
  %v34 = vld [vmem:[%s1 + $0x68] sm:$0xff]
  %v35 = vld [vmem:[%s1 + $0x70] sm:$0xff]
  %v36 = vld [vmem:[%s1 + $0x78] sm:$0xff]
  %v37 = vld [vmem:[%s0] sm:$0xff]
  %v38 = vld [vmem:[%s0 + $0x8] sm:$0xff]
  %v39 = vld [vmem:[%s0 + $0x10] sm:$0xff]
  %v40 = vld [vmem:[%s0 + $0x18] sm:$0xff]
  %v41 = vld [vmem:[%s2] sm:$0xff]
  %v42 = vld [vmem:[%s2 + $0x8] sm:$0xff]
  %v43 = vld [vmem:[%s2 + $0x10] sm:$0xff]
  %v44 = vld [vmem:[%s2 + $0x18] sm:$0xff]
  %v45 = vld [vmem:[%s2 + $0x20] sm:$0xff]
  %v46 = vld [vmem:[%s2 + $0x28] sm:$0xff]
  %v47 = vld [vmem:[%s2 + $0x30] sm:$0xff]
  %v48 = vld [vmem:[%s2 + $0x38] sm:$0xff]
  %v49 = vld [vmem:[%s2 + $0x40] sm:$0xff]
  %v50 = vld [vmem:[%s2 + $0x48] sm:$0xff]
  %v51 = vld [vmem:[%s2 + $0x50] sm:$0xff]
  %v52 = vld [vmem:[%s2 + $0x58] sm:$0xff]
  %v53 = vld [vmem:[%s2 + $0x60] sm:$0xff]
  %v54 = vld [vmem:[%s2 + $0x68] sm:$0xff]
  %v55 = vld [vmem:[%s2 + $0x70] sm:$0xff]
  %v56 = vld [vmem:[%s2 + $0x78] sm:$0xff]
  %58 = vset.pattern.permute.xlu0 0
  %59 = vperm.xlu0 %58, %v41
  %v60 = vpop.permute.xlu0 %59
  %63 = vset.pattern.permute.xlu0 0
  %64 = vperm.xlu0 %63, %v42
  %v65 = vpop.permute.xlu0 %64
  %68 = vset.pattern.permute.xlu0 0
  %69 = vperm.xlu0 %68, %v43
  %v70 = vpop.permute.xlu0 %69
  %73 = vset.pattern.permute.xlu0 0
  %74 = vperm.xlu0 %73, %v44
  %v75 = vpop.permute.xlu0 %74
  %78 = vset.pattern.permute.xlu0 0
  %79 = vperm.xlu0 %78, %v45
  %v80 = vpop.permute.xlu0 %79
  %83 = vset.pattern.permute.xlu0 0
  %84 = vperm.xlu0 %83, %v46
  %v85 = vpop.permute.xlu0 %84
  %88 = vset.pattern.permute.xlu0 0
  %89 = vperm.xlu0 %88, %v47
  %v90 = vpop.permute.xlu0 %89
  %93 = vset.pattern.permute.xlu0 0
  %94 = vperm.xlu0 %93, %v48
  %v95 = vpop.permute.xlu0 %94
  %98 = vset.pattern.permute.xlu0 0
  %99 = vperm.xlu0 %98, %v49
  %v100 = vpop.permute.xlu0 %99
  %103 = vset.pattern.permute.xlu0 0
  %104 = vperm.xlu0 %103, %v50
  %v105 = vpop.permute.xlu0 %104
  %108 = vset.pattern.permute.xlu0 0
  %109 = vperm.xlu0 %108, %v51
  %v110 = vpop.permute.xlu0 %109
  %113 = vset.pattern.permute.xlu0 0
  %114 = vperm.xlu0 %113, %v52
  %v115 = vpop.permute.xlu0 %114
  %118 = vset.pattern.permute.xlu0 0
  %119 = vperm.xlu0 %118, %v53
  %v120 = vpop.permute.xlu0 %119
  %123 = vset.pattern.permute.xlu0 0
  %124 = vperm.xlu0 %123, %v54
  %v125 = vpop.permute.xlu0 %124
  %128 = vset.pattern.permute.xlu0 0
  %129 = vperm.xlu0 %128, %v55
  %v130 = vpop.permute.xlu0 %129
  %133 = vset.pattern.permute.xlu0 0
  %134 = vperm.xlu0 %133, %v56
  %v135 = vpop.permute.xlu0 %134
  %vm137 = vcmask 261120
  %v139 = vsel %vm137, %v21, 0
  %v142 = vsel %vm137, %v22, 0
  %v145 = vsel %vm137, %v23, 0
  %v148 = vsel %vm137, %v24, 0
  %v151 = vsel %vm137, %v25, 0
  %v154 = vsel %vm137, %v26, 0
  %v157 = vsel %vm137, %v27, 0
  %v160 = vsel %vm137, %v28, 0
  %v163 = vsel %vm137, %v29, 0
  %v166 = vsel %vm137, %v30, 0
  %v169 = vsel %vm137, %v31, 0
  %v172 = vsel %vm137, %v32, 0
  %v175 = vsel %vm137, %v33, 0
  %v178 = vsel %vm137, %v34, 0
  %v181 = vsel %vm137, %v35, 0
  %v184 = vsel %vm137, %v36, 0
  %186 = vmatprep.subr.mxu0 0.0
  %187 = vmatpush1.msra.mxu0 %v37
  %188 = vmatprep.subr.mxu0 0.0
  %189 = vmatpush1.msra.mxu0 %v38
  %190 = vmatprep.subr.mxu0 0.0
  %191 = vmatpush1.msra.mxu0 %v39
  %192 = vmatprep.subr.mxu0 0.0
  %193 = vmatpush1.msra.mxu0 %v40
  %194 = vmatprep.subr.mxu0 0.0
  %195 = vmatpush1.msra.mxu0 0.0
  %196 = vmatprep.subr.mxu0 0.0
  %197 = vmatpush1.msra.mxu0 0.0
  %198 = vmatprep.subr.mxu0 0.0
  %199 = vmatpush1.msra.mxu0 0.0
  %200 = vmatprep.subr.mxu0 0.0
  %201 = vmatpush1.msra.mxu0 0.0
  %202 = vmatprep.subr.mxu0 0.0
  %203 = vmatpush1.msra.mxu0 0.0
  %204 = vmatprep.subr.mxu0 0.0
  %205 = vmatpush1.msra.mxu0 0.0
  %206 = vmatprep.subr.mxu0 0.0
  %207 = vmatpush1.msra.mxu0 0.0
  %208 = vmatprep.subr.mxu0 0.0
  %209 = vmatpush1.msra.mxu0 0.0
  %210 = vmatprep.subr.mxu0 0.0
  %211 = vmatpush1.msra.mxu0 0.0
  %212 = vmatprep.subr.mxu0 0.0
  %213 = vmatpush1.msra.mxu0 0.0
  %214 = vmatprep.subr.mxu0 0.0
  %215 = vmatpush1.msra.mxu0 0.0
  %216 = vmatprep.subr.mxu0 0.0
  %217 = vmatpush1.msra.mxu0 0.0
  %218 = vmatprep.subr.mxu0 0.0
  %219 = vmatpush1.msra.mxu0 0.0
  %220 = vmatprep.subr.mxu0 0.0
  %221 = vmatpush1.msra.mxu0 0.0
  %222 = vmatprep.subr.mxu0 0.0
  %223 = vmatpush1.msra.mxu0 0.0
  %224 = vmatprep.subr.mxu0 0.0
  %225 = vmatpush1.msra.mxu0 0.0
  %226 = vmatprep.subr.mxu0 0.0
  %227 = vmatpush1.msra.mxu0 0.0
  %228 = vmatprep.subr.mxu0 0.0
  %229 = vmatpush1.msra.mxu0 0.0
  %230 = vmatprep.subr.mxu0 0.0
  %231 = vmatpush1.msra.mxu0 0.0
  %232 = vmatprep.subr.mxu0 0.0
  %233 = vmatpush1.msra.mxu0 0.0
  %234 = vmatprep.subr.mxu0 0.0
  %235 = vmatpush1.msra.mxu0 0.0
  %236 = vmatprep.subr.mxu0 0.0
  %237 = vmatpush1.msra.mxu0 0.0
  %238 = vmatprep.subr.mxu0 0.0
  %239 = vmatpush1.msra.mxu0 0.0
  %240 = vmatprep.subr.mxu0 0.0
  %241 = vmatpush1.msra.mxu0 0.0
  %242 = vmatprep.subr.mxu0 0.0
  %243 = vmatpush1.msra.mxu0 0.0
  %244 = vmatprep.subr.mxu0 0.0
  %245 = vmatpush1.msra.mxu0 0.0
  %246 = vmatprep.subr.mxu0 0.0
  %247 = vmatpush1.msra.mxu0 0.0
  %248 = vmatprep.subr.mxu0 0.0
  %249 = vmatpush1.msra.mxu0 0.0
  %250 = vmatprep.mubr.f32.mxu0 0.0
  %251 = vmatmul.mubr.f32.gmra.mrb[0].mxu0 %v139
  %v252 = vpop.f32.mrb[0].mxu0
  %v253 = vadd.f32 %v60, %v252
  %v254 = vpop.f32.mrb[0].mxu0
  %255 = vmatprep.mubr.f32.mxu0 0.0
  %256 = vmatmul.mubr.f32.gmra.mrb[0].mxu0 %v142
  %v257 = vpop.f32.mrb[0].mxu0
  %v258 = vadd.f32 %v65, %v257
  %v259 = vpop.f32.mrb[0].mxu0
  %260 = vmatprep.mubr.f32.mxu0 0.0
  %261 = vmatmul.mubr.f32.gmra.mrb[0].mxu0 %v145
  %v262 = vpop.f32.mrb[0].mxu0
  %v263 = vadd.f32 %v70, %v262
  %v264 = vpop.f32.mrb[0].mxu0
  %265 = vmatprep.mubr.f32.mxu0 0.0
  %266 = vmatmul.mubr.f32.gmra.mrb[0].mxu0 %v148
  %v267 = vpop.f32.mrb[0].mxu0
  %v268 = vadd.f32 %v75, %v267
  %v269 = vpop.f32.mrb[0].mxu0
  %270 = vmatprep.mubr.f32.mxu0 0.0
  %271 = vmatmul.mubr.f32.gmra.mrb[0].mxu0 %v151
  %v272 = vpop.f32.mrb[0].mxu0
  %v273 = vadd.f32 %v80, %v272
  %v274 = vpop.f32.mrb[0].mxu0
  %275 = vmatprep.mubr.f32.mxu0 0.0
  %276 = vmatmul.mubr.f32.gmra.mrb[0].mxu0 %v154
  %v277 = vpop.f32.mrb[0].mxu0
  %v278 = vadd.f32 %v85, %v277
  %v279 = vpop.f32.mrb[0].mxu0
  %280 = vmatprep.mubr.f32.mxu0 0.0
  %281 = vmatmul.mubr.f32.gmra.mrb[0].mxu0 %v157
  %v282 = vpop.f32.mrb[0].mxu0
  %v283 = vadd.f32 %v90, %v282
  %v284 = vpop.f32.mrb[0].mxu0
  %285 = vmatprep.mubr.f32.mxu0 0.0
  %286 = vmatmul.mubr.f32.gmra.mrb[0].mxu0 %v160
  %v287 = vpop.f32.mrb[0].mxu0
  %v288 = vadd.f32 %v95, %v287
  %v289 = vpop.f32.mrb[0].mxu0
  %290 = vmatprep.mubr.f32.mxu0 0.0
  %291 = vmatmul.mubr.f32.gmra.mrb[0].mxu0 %v163
  %v292 = vpop.f32.mrb[0].mxu0
  %v293 = vadd.f32 %v100, %v292
  %v294 = vpop.f32.mrb[0].mxu0
  %295 = vmatprep.mubr.f32.mxu0 0.0
  %296 = vmatmul.mubr.f32.gmra.mrb[0].mxu0 %v166
  %v297 = vpop.f32.mrb[0].mxu0
  %v298 = vadd.f32 %v105, %v297
  %v299 = vpop.f32.mrb[0].mxu0
  %300 = vmatprep.mubr.f32.mxu0 0.0
  %301 = vmatmul.mubr.f32.gmra.mrb[0].mxu0 %v169
  %v302 = vpop.f32.mrb[0].mxu0
  %v303 = vadd.f32 %v110, %v302
  %v304 = vpop.f32.mrb[0].mxu0
  %305 = vmatprep.mubr.f32.mxu0 0.0
  %306 = vmatmul.mubr.f32.gmra.mrb[0].mxu0 %v172
  %v307 = vpop.f32.mrb[0].mxu0
  %v308 = vadd.f32 %v115, %v307
  %v309 = vpop.f32.mrb[0].mxu0
  %310 = vmatprep.mubr.f32.mxu0 0.0
  %311 = vmatmul.mubr.f32.gmra.mrb[0].mxu0 %v175
  %v312 = vpop.f32.mrb[0].mxu0
  %v313 = vadd.f32 %v120, %v312
  %v314 = vpop.f32.mrb[0].mxu0
  %315 = vmatprep.mubr.f32.mxu0 0.0
  %316 = vmatmul.mubr.f32.gmra.mrb[0].mxu0 %v178
  %v317 = vpop.f32.mrb[0].mxu0
  %v318 = vadd.f32 %v125, %v317
  %v319 = vpop.f32.mrb[0].mxu0
  %320 = vmatprep.mubr.f32.mxu0 0.0
  %321 = vmatmul.mubr.f32.gmra.mrb[0].mxu0 %v181
  %v322 = vpop.f32.mrb[0].mxu0
  %v323 = vadd.f32 %v130, %v322
  %v324 = vpop.f32.mrb[0].mxu0
  %325 = vmatprep.mubr.f32.mxu0 0.0
  %326 = vmatmul.mubr.f32.gmra.mrb[0].mxu0 %v184
  %v327 = vpop.f32.mrb[0].mxu0
  %v328 = vadd.f32 %v135, %v327
  %v329 = vpop.f32.mrb[0].mxu0
  %330 = vdwg.mxu0
  %vm331 = vcmp.gt.f32.partialorder %v253, 0.0
  %vm332 = vcmp.gt.f32.partialorder %v258, 0.0
  %vm333 = vcmp.gt.f32.partialorder %v263, 0.0
  %vm334 = vcmp.gt.f32.partialorder %v268, 0.0
  %vm335 = vcmp.gt.f32.partialorder %v273, 0.0
  %vm336 = vcmp.gt.f32.partialorder %v278, 0.0
  %vm337 = vcmp.gt.f32.partialorder %v283, 0.0
  %vm338 = vcmp.gt.f32.partialorder %v288, 0.0
  %vm339 = vcmp.gt.f32.partialorder %v293, 0.0
  %vm340 = vcmp.gt.f32.partialorder %v298, 0.0
  %vm341 = vcmp.gt.f32.partialorder %v303, 0.0
  %vm342 = vcmp.gt.f32.partialorder %v308, 0.0
  %vm343 = vcmp.gt.f32.partialorder %v313, 0.0
  %vm344 = vcmp.gt.f32.partialorder %v318, 0.0
  %vm345 = vcmp.gt.f32.partialorder %v323, 0.0
  %vm346 = vcmp.gt.f32.partialorder %v328, 0.0
  %v347 = vmul.f32 %v253, 0.01
  %v348 = vmul.f32 %v258, 0.01
  %v349 = vmul.f32 %v263, 0.01
  %v350 = vmul.f32 %v268, 0.01
  %v351 = vmul.f32 %v273, 0.01
  %v352 = vmul.f32 %v278, 0.01
  %v353 = vmul.f32 %v283, 0.01
  %v354 = vmul.f32 %v288, 0.01
  %v355 = vmul.f32 %v293, 0.01
  %v356 = vmul.f32 %v298, 0.01
  %v357 = vmul.f32 %v303, 0.01
  %v358 = vmul.f32 %v308, 0.01
  %v359 = vmul.f32 %v313, 0.01
  %v360 = vmul.f32 %v318, 0.01
  %v361 = vmul.f32 %v323, 0.01
  %v362 = vmul.f32 %v328, 0.01
  %v363 = vsel %vm331, %v253, %v347
  %v364 = vsel %vm332, %v258, %v348
  %v365 = vsel %vm333, %v263, %v349
  %v366 = vsel %vm334, %v268, %v350
  %v367 = vsel %vm335, %v273, %v351
  %v368 = vsel %vm336, %v278, %v352
  %v369 = vsel %vm337, %v283, %v353
  %v370 = vsel %vm338, %v288, %v354
  %v371 = vsel %vm339, %v293, %v355
  %v372 = vsel %vm340, %v298, %v356
  %v373 = vsel %vm341, %v303, %v357
  %v374 = vsel %vm342, %v308, %v358
  %v375 = vsel %vm343, %v313, %v359
  %v376 = vsel %vm344, %v318, %v360
  %v377 = vsel %vm345, %v323, %v361
  %v378 = vsel %vm346, %v328, %v362
  %v379 = vld [vmem:[%s3] sm:$0xff]
  %v380 = vld [vmem:[%s3 + $0x8] sm:$0xff]
  %v381 = vld [vmem:[%s3 + $0x10] sm:$0xff]
  %v382 = vld [vmem:[%s3 + $0x18] sm:$0xff]
  %v383 = vld [vmem:[%s3 + $0x20] sm:$0xff]
  %v384 = vld [vmem:[%s3 + $0x28] sm:$0xff]
  %v385 = vld [vmem:[%s3 + $0x30] sm:$0xff]
  %v386 = vld [vmem:[%s3 + $0x38] sm:$0xff]
  %v387 = vld [vmem:[%s3 + $0x40] sm:$0xff]
  %v388 = vld [vmem:[%s3 + $0x48] sm:$0xff]
  %v389 = vld [vmem:[%s3 + $0x50] sm:$0xff]
  %v390 = vld [vmem:[%s3 + $0x58] sm:$0xff]
  %v391 = vld [vmem:[%s3 + $0x60] sm:$0xff]
  %v392 = vld [vmem:[%s3 + $0x68] sm:$0xff]
  %v393 = vld [vmem:[%s3 + $0x70] sm:$0xff]
  %v394 = vld [vmem:[%s3 + $0x78] sm:$0xff]
  %396 = vset.pattern.permute.xlu0 0
  %397 = vperm.xlu0 %396, %v379
  %v398 = vpop.permute.xlu0 %397
  %401 = vset.pattern.permute.xlu0 0
  %402 = vperm.xlu0 %401, %v380
  %v403 = vpop.permute.xlu0 %402
  %406 = vset.pattern.permute.xlu0 0
  %407 = vperm.xlu0 %406, %v381
  %v408 = vpop.permute.xlu0 %407
  %411 = vset.pattern.permute.xlu0 0
  %412 = vperm.xlu0 %411, %v382
  %v413 = vpop.permute.xlu0 %412
  %416 = vset.pattern.permute.xlu0 0
  %417 = vperm.xlu0 %416, %v383
  %v418 = vpop.permute.xlu0 %417
  %421 = vset.pattern.permute.xlu0 0
  %422 = vperm.xlu0 %421, %v384
  %v423 = vpop.permute.xlu0 %422
  %426 = vset.pattern.permute.xlu0 0
  %427 = vperm.xlu0 %426, %v385
  %v428 = vpop.permute.xlu0 %427
  %431 = vset.pattern.permute.xlu0 0
  %432 = vperm.xlu0 %431, %v386
  %v433 = vpop.permute.xlu0 %432
  %436 = vset.pattern.permute.xlu0 0
  %437 = vperm.xlu0 %436, %v387
  %v438 = vpop.permute.xlu0 %437
  %441 = vset.pattern.permute.xlu0 0
  %442 = vperm.xlu0 %441, %v388
  %v443 = vpop.permute.xlu0 %442
  %446 = vset.pattern.permute.xlu0 0
  %447 = vperm.xlu0 %446, %v389
  %v448 = vpop.permute.xlu0 %447
  %451 = vset.pattern.permute.xlu0 0
  %452 = vperm.xlu0 %451, %v390
  %v453 = vpop.permute.xlu0 %452
  %456 = vset.pattern.permute.xlu0 0
  %457 = vperm.xlu0 %456, %v391
  %v458 = vpop.permute.xlu0 %457
  %461 = vset.pattern.permute.xlu0 0
  %462 = vperm.xlu0 %461, %v392
  %v463 = vpop.permute.xlu0 %462
  %466 = vset.pattern.permute.xlu0 0
  %467 = vperm.xlu0 %466, %v393
  %v468 = vpop.permute.xlu0 %467
  %471 = vset.pattern.permute.xlu0 0
  %472 = vperm.xlu0 %471, %v394
  %v473 = vpop.permute.xlu0 %472
  %v475 = vmul.f32 %v363, %v398
  %v476 = vmul.f32 %v364, %v403
  %v477 = vmul.f32 %v365, %v408
  %v478 = vmul.f32 %v366, %v413
  %v479 = vmul.f32 %v367, %v418
  %v480 = vmul.f32 %v368, %v423
  %v481 = vmul.f32 %v369, %v428
  %v482 = vmul.f32 %v370, %v433
  %v483 = vmul.f32 %v371, %v438
  %v484 = vmul.f32 %v372, %v443
  %v485 = vmul.f32 %v373, %v448
  %v486 = vmul.f32 %v374, %v453
  %v487 = vmul.f32 %v375, %v458
  %v488 = vmul.f32 %v376, %v463
  %v489 = vmul.f32 %v377, %v468
  %v490 = vmul.f32 %v378, %v473
  %v491 = vadd.f32 %v475, %v476
  %v492 = vadd.f32 %v491, %v477
  %v493 = vadd.f32 %v492, %v478
  %v494 = vadd.f32 %v493, %v479
  %v495 = vadd.f32 %v494, %v480
  %v496 = vadd.f32 %v495, %v481
  %v497 = vadd.f32 %v496, %v482
  %v498 = vadd.f32 %v497, %v483
  %v499 = vadd.f32 %v498, %v484
  %v500 = vadd.f32 %v499, %v485
  %v501 = vadd.f32 %v500, %v486
  %v502 = vadd.f32 %v501, %v487
  %v503 = vadd.f32 %v502, %v488
  %v504 = vadd.f32 %v503, %v489
  %v505 = vadd.f32 %v504, %v490
  %v506 = vrot.slane %v505, 4
  %v507 = vadd.f32 %v505, %v506
  %v508 = vrot.slane %v507, 2
  %v509 = vadd.f32 %v507, %v508
  %v510 = vrot.slane %v509, 1
  %v511 = vadd.f32 %v509, %v510
  %s512 = sld [smem:[#allocation2]]
  %v513 = vstv %s512
  %v514 = vadd.f32 %v511, %v513
  %v515 = vsub.f32 0.0, %v514
  %v516 = vmul.f32 %v515, 1.442695
  %v517 = vpow.pop %v516
  %v518 = vadd.f32 %v517, 1.0
  %v519 = vrcp.pop %v518
  %520 = vst [vmem:[%s5] sm:$0x1] %v519
  // Predicated region
  $region22: #{discriminator_forward.1} parent=0 // pred_check
    _
  $region23: #{discriminator_forward.1} parent=0 // pred_check_branch
    %522 = sbr.rel (0) target = $region25
  $region24: #{discriminator_forward.1} parent=0 // pred_region
    _
  $region25: #{discriminator_forward.1} parent=0 // pred_fallthru
    _
  // Predicated region
  $region26: #{discriminator_forward.1} parent=0 // pred_check
    _
  $region27: #{discriminator_forward.1} parent=0 // pred_check_branch
    %524 = sbr.rel (0) target = $region29
  $region28: #{discriminator_forward.1} parent=0 // pred_region
    _
  $region29: #{discriminator_forward.1} parent=0 // pred_fallthru
    _

</llo_original>
